<compile_context>
chip_gen: v7x
topology: tpu7x:2x2x1
jax: 0.10.0
libtpu: 0.0.40
codegen_flags: <defaults>
</compile_context>

<pallas_src>
import math

import jax
import jax.numpy as jnp
from jax.experimental import pallas as pl
from jax.experimental.pallas import tpu as pltpu

_LANE = 128
_SUBLANE = 8


def _drop_path_kernel(x_ref, s_ref, o_ref):
    """x_ref/o_ref: (tile_b, tile_n) VMEM; s_ref: (tile_b, 1) per-sample scale."""
    o_ref[...] = x_ref[...] * s_ref[...]      # lane-broadcast multiply, HBM-bound


def _target_block_bytes():
    # v6e/v7x: HBM is 2-3x faster, fixed ~0.35us/step cost unchanged -> bigger
    # blocks.  v5e: 2 MiB keeps 4x double-buffered blocks well under its
    # 16 MiB scoped-VMEM default.
    try:
        kind = jax.devices()[0].device_kind.lower()
    except Exception:
        kind = ""
    if "v6" in kind or "v7" in kind:
        return 4 * 1024 * 1024
    return 2 * 1024 * 1024


def _choose_tiles(b, n, itemsize, target_bytes):
    """Pick (tile_b, tile_n) so block bytes <= target and step count ~ total bytes."""
    max_elems = max(1, target_bytes // itemsize)
    if b <= _SUBLANE:
        tile_b = b                                    # == full dim (always legal)
    else:
        rows_fit = max_elems // max(n, 1)             # whole samples per block
        if rows_fit >= b:
            tile_b = b
        else:
            tile_b = max(_SUBLANE, (rows_fit // _SUBLANE) * _SUBLANE)
    per_row = max(1, max_elems // tile_b)
    if n <= per_row:
        tile_n = n                                    # == full dim (always legal)
    else:
        tile_n = max(_LANE, (per_row // _LANE) * _LANE)   # lane-dense, ragged tail masked
    return tile_b, tile_n


def drop_path(x, drop_prob: float = 0.0, training: bool = False, *,
              key=None, donate_x: bool = False, block_bytes=None):
    """JAX/Pallas equivalent of the PyTorch `drop_path` forward."""
    if drop_prob == 0.0 or not training:
        return x
    if key is None:
        raise ValueError("drop_path: a PRNG key is required when training with drop_prob > 0")
    keep_prob = 1.0 - float(drop_prob)

    orig_shape = x.shape
    b = orig_shape[0]
    n = int(math.prod(orig_shape[1:])) if len(orig_shape) > 1 else 1
    if b == 0 or n == 0:
        return x

    # Per-sample scale (B scalars): floor(keep_prob + U[0,1)) / keep_prob.
    u = jax.random.uniform(key, (b,), dtype=jnp.float32)
    scale = (jnp.floor(jnp.float32(keep_prob) + u) * jnp.float32(1.0 / keep_prob))
    scale2 = scale.astype(x.dtype).reshape(b, 1)

    itemsize = jnp.dtype(x.dtype).itemsize
    target = int(block_bytes) if block_bytes is not None else _target_block_bytes()
    tile_b, tile_n = _choose_tiles(b, n, itemsize, target)

    x2 = x.reshape(b, n)                              # free (row-major) view
    grid = (pl.cdiv(b, tile_b), pl.cdiv(n, tile_n))   # ragged boundaries masked by Pallas

    cost = pl.CostEstimate(flops=b * n, transcendentals=0,
                           bytes_accessed=2 * b * n * itemsize + b * itemsize)

    out = pl.pallas_call(
        _drop_path_kernel,
        out_shape=jax.ShapeDtypeStruct((b, n), x.dtype),
        grid=grid,
        in_specs=[
            pl.BlockSpec((tile_b, tile_n), lambda i, j: (i, j)),
            # same scale block across the inner (feature) axis -> re-fetch skipped
            pl.BlockSpec((tile_b, 1), lambda i, j: (i, 0)),
        ],
        out_specs=pl.BlockSpec((tile_b, tile_n), lambda i, j: (i, j)),
        compiler_params=pltpu.CompilerParams(
            dimension_semantics=("parallel", "parallel")),
        cost_estimate=cost,
        input_output_aliases={0: 0} if donate_x else {},
    )(x2, scale2)

    return out.reshape(orig_shape)


class DropPath:
    """Mirror of the PyTorch DropPath module (no learnable parameters)."""

    def __init__(self, drop_prob=None):
        self.drop_prob = 0.0 if drop_prob is None else float(drop_prob)
        self.training = True

    def __call__(self, x, *, key=None, donate_x=False):
        return drop_path(x, self.drop_prob, self.training, key=key, donate_x=donate_x)


if __name__ == "__main__":
    root = jax.random.PRNGKey(0)
    # Small NCHW input, consistent with use inside a conv/transformer block.
    x = jax.random.normal(root, (2, 4, 16, 16), dtype=jnp.float32)

    # Eval mode / drop_prob = 0  ->  identity (no kernel launch).
    mod_eval = DropPath(drop_prob=0.25)
    mod_eval.training = False
    y_eval = jax.block_until_ready(mod_eval(x))
    assert jnp.array_equal(y_eval, x), "eval mode must be identity"

    # Training: every sample is either all-zero or x / keep_prob.
    keep_prob = 0.75
    mod = DropPath(drop_prob=0.25)
    mod.training = True
    y = jax.block_until_ready(mod(x, key=jax.random.PRNGKey(123)))
    for bi in range(x.shape[0]):
        zeroed = bool(jnp.all(y[bi] == 0))
        scaled = bool(jnp.allclose(y[bi], x[bi] / keep_prob, rtol=1e-5, atol=1e-5))
        assert zeroed or scaled, "per-sample output must be 0 or x/keep_prob"

    # Ragged-boundary exercise: B not a multiple of 8, n not a multiple of 128,
    # forced small block so the grid has partial blocks on BOTH axes.
    x_r = jax.random.normal(jax.random.PRNGKey(1), (10, 3, 33, 33), dtype=jnp.float32)
    y_r = jax.block_until_ready(
        drop_path(x_r, 0.4, True, key=jax.random.PRNGKey(2), block_bytes=64 * 1024))
    kp_r = 0.6
    for bi in range(x_r.shape[0]):
        zeroed = bool(jnp.all(y_r[bi] == 0))
        scaled = bool(jnp.allclose(y_r[bi], x_r[bi] / kp_r, rtol=1e-5, atol=1e-5))
        assert zeroed or scaled, "ragged path: per-sample output must be 0 or x/keep_prob"

    # donate_x path (input_output_aliases) -- compare against a host copy taken
    # before the call, since the input buffer may be reused for the output.
    x_d = jax.random.normal(jax.random.PRNGKey(3), (2, 8, 32), dtype=jnp.float32)
    x_d_host = jax.device_get(x_d)
    y_d = jax.block_until_ready(
        drop_path(x_d, 0.5, True, key=jax.random.PRNGKey(4), donate_x=True))
    y_d_host = jax.device_get(y_d)
    for bi in range(x_d_host.shape[0]):
        zeroed = bool(jnp.all(jnp.asarray(y_d_host[bi]) == 0))
        scaled = bool(jnp.allclose(y_d_host[bi], x_d_host[bi] / 0.5, rtol=1e-5, atol=1e-5))
        assert zeroed or scaled, "donated path: per-sample output must be 0 or x/keep_prob"

    print("KERNEL_OK")
</pallas_src>

<mosaic_0001>
module attributes {stable_mosaic.version = 11 : i64} {
  func.func @_drop_path_kernel(%arg0: i32, %arg1: i32, %arg2: memref<2x1024xf32, #tpu.memory_space<vmem>>, %arg3: memref<2x1xf32, #tpu.memory_space<vmem>>, %arg4: memref<2x1024xf32, #tpu.memory_space<vmem>>) attributes {dimension_semantics = [#tpu.dimension_semantics<parallel>, #tpu.dimension_semantics<parallel>], iteration_bounds = array<i64: 1, 1>, scalar_prefetch = 0 : i64, scratch_operands = 0 : i64, tpu.core_type = #tpu.core_type<tc>, window_params = [{transform_indices = @transform_0, window_bounds = array<i64: 2, 1024>}, {transform_indices = @transform_1, window_bounds = array<i64: 2, 1>}, {transform_indices = @transform_2, window_bounds = array<i64: 2, 1024>}]} {
    %c0 = arith.constant 0 : index
    %c0_0 = arith.constant 0 : index
    %0 = vector.load %arg2[%c0, %c0_0] : memref<2x1024xf32, #tpu.memory_space<vmem>>, vector<2x1024xf32>
    %c0_1 = arith.constant 0 : index
    %c0_2 = arith.constant 0 : index
    %1 = vector.load %arg3[%c0_1, %c0_2] : memref<2x1xf32, #tpu.memory_space<vmem>>, vector<2x1xf32>
    %2 = vector.broadcast %1 : vector<2x1xf32> to vector<2x1024xf32>
    %3 = arith.mulf %0, %2 : vector<2x1024xf32>
    %c0_3 = arith.constant 0 : index
    %c0_4 = arith.constant 0 : index
    %4 = vector.load %arg4[%c0_3, %c0_4] : memref<2x1024xf32, #tpu.memory_space<vmem>>, vector<2x1024xf32>
    tpu.vector_store %arg4[%c0_3, %c0_4], %3 {strides = array<i32>} : memref<2x1024xf32, #tpu.memory_space<vmem>>, vector<2x1024xf32>,
    return
  }
  func.func @transform_0(%arg0: i32, %arg1: i32) -> (i32, i32) {
    %c0_i32 = arith.constant 0 : i32
    return %arg0, %arg1 : i32, i32
  }
  func.func @transform_1(%arg0: i32, %arg1: i32) -> (i32, i32) {
    %c0_i32 = arith.constant 0 : i32
    %c0_i32_0 = arith.constant 0 : i32
    return %arg0, %c0_i32 : i32, i32
  }
  func.func @transform_2(%arg0: i32, %arg1: i32) -> (i32, i32) {
    %c0_i32 = arith.constant 0 : i32
    return %arg0, %arg1 : i32, i32
  }
}

</mosaic_0001>

<llo_original>
// kernel: tpu_custom_call.1
$region0: #{tpu_custom_call.1}
  #allocation0 [shape = 'u32[]', space=smem, size = 0x4, offset = 0x4, fixed_abs, tag = 'smem constant byte address 0x4 - core index']
  #allocation1 [shape = 'u32[144,128]{1,0:T(1,128)}', space=vmem, size = 0x12000, scoped, tag = 'internal scratch']
  %s0 = inlined_call_operand.hbm [shape: f32[2,1024], index: 0, kind: input, shape index: {}]
  %s1 = inlined_call_operand.vmem [shape: f32[2,1], index: 1, kind: input, shape index: {}]
  %s2 = inlined_call_operand.hbm [shape: f32[2,1024], index: 2, kind: output, shape index: {}]
  %s3 = sld [smem:[#allocation0]]
  $region22: #{tpu_custom_call.1} parent=0
    _
  %s5 = ssub.s32 1, %s3
  %s6 = scalar_select 0, %s5, %s3
  $region1: #{tpu_custom_call.1} parent=0
    #allocation2 [shape = 'u8[8192]{0}', space=vmem, size = 0x2000, scoped, tag = 'input window, operand 0, single buffered']
    #allocation3 [shape = 's32[1]{0}', space=sflag, size = 0x4, scoped, tag = 'scoped memory for tpu_custom_call.1']
    #allocation4 [shape = 's32[1]{0}', space=sflag, size = 0x4, scoped, tag = 'scoped memory for tpu_custom_call.1']
    #allocation5 [shape = 'u8[8192]{0}', space=vmem, size = 0x2000, scoped, tag = 'output window, operand 0, single buffered']
    %7 = vsyncpa [#allocation3], 0
    %8 = vsyncpa [#allocation4], 0
    // Predicated region
    $region2: #{tpu_custom_call.1} parent=1 // pred_check
      _
    $region3: #{tpu_custom_call.1} parent=1 // pred_check_branch
      %10 = sbr.rel (0) target = $region5
    $region4: #{tpu_custom_call.1} parent=1 // pred_region
      %s12 = ssub.s32 256, 256
      %13 = vsyncadd [#allocation3], %s12
      %s15 = sshll.u32 [#allocation2], 4
      %s16 = int_to_ptr.vmem [resolvable:$true] %s15
      %18 = dma.hbm_to_vmem [thread:$0]  %s0, 256, %s16, [#allocation3]
    $region5: #{tpu_custom_call.1} parent=1 // pred_fallthru
      _
    // Predicated region
    $region6: #{tpu_custom_call.1} parent=1 // pred_check
      _
    $region7: #{tpu_custom_call.1} parent=1 // pred_check_branch
      %20 = sbr.rel (0) target = $region9
    $region8: #{tpu_custom_call.1} parent=1 // pred_region
      _
    $region9: #{tpu_custom_call.1} parent=1 // pred_fallthru
      _
    // Predicated region
    $region10: #{tpu_custom_call.1} parent=1 // pred_check
      _
    $region11: #{tpu_custom_call.1} parent=1 // pred_check_branch
      %22 = sbr.rel (0) target = $region13
    $region12: #{tpu_custom_call.1} parent=1 // pred_region
      %23 = dma.done [#allocation3], 256
    $region13: #{tpu_custom_call.1} parent=1 // pred_fallthru
      _
    %v24 = vld [vmem:[#allocation2] sm:$0xff]
    %v25 = vld [vmem:[#allocation2 + $0x8] sm:$0xff]
    %v26 = vld [vmem:[%s1] sm:$0x3]
    %28 = vset.pattern.permute.xlu0 0
    %29 = vperm.xlu0 %28, %v26
    %v30 = vpop.permute.xlu0 %29
    %v32 = vunpack.c.l.s4 269488144
    %v33 = vunpack.c.0.s8 %v32
    %v34 = vlaneseq
    %v35 = vshrl.u32 %v34, 7
    %v36 = vsub.s32 %v33, %v35
    %v37 = vrot.slane %v30, %v36
    %v39 = vmul.f32 %v24, %v37
    %v40 = vmul.f32 %v25, %v37
    %41 = vst [vmem:[#allocation5] sm:$0xff] %v39
    %42 = vst [vmem:[#allocation5 + $0x8] sm:$0xff] %v40
    // Predicated region
    $region14: #{tpu_custom_call.1} parent=1 // pred_check
      _
    $region15: #{tpu_custom_call.1} parent=1 // pred_check_branch
      %44 = sbr.rel (0) target = $region17
    $region16: #{tpu_custom_call.1} parent=1 // pred_region
      %s46 = ssub.s32 256, 256
      %47 = vsyncadd [#allocation4], %s46
      %s49 = sshll.u32 [#allocation5], 4
      %s50 = int_to_ptr.vmem [resolvable:$true] %s49
      %52 = dma.vmem_to_hbm [thread:$0]  %s50, 256, %s2, [#allocation4]
    $region17: #{tpu_custom_call.1} parent=1 // pred_fallthru
      _
    // Predicated region
    $region18: #{tpu_custom_call.1} parent=1 // pred_check
      _
    $region19: #{tpu_custom_call.1} parent=1 // pred_check_branch
      %54 = sbr.rel (0) target = $region21
    $region20: #{tpu_custom_call.1} parent=1 // pred_region
      %55 = dma.done [#allocation4], 256
    $region21: #{tpu_custom_call.1} parent=1 // pred_fallthru
      _
    %56 = vsyncpa [#allocation3], 1
    %57 = vsyncpa [#allocation4], 1

</llo_original>
